<compile_context>
chip_gen: v7x
topology: tpu7x:2x2x1
jax: 0.10.0
libtpu: 0.0.40
codegen_flags: <defaults>
</compile_context>

<pallas_src>
import numpy as np

import jax
import jax.numpy as jnp
from jax.experimental import pallas as pl
from jax.experimental.pallas import tpu as pltpu  # noqa: F401  (kept for TPU backend symmetry)


def _noop_alias_kernel(in_ref, out_ref):
    # `in_ref` and `out_ref` are the SAME HBM buffer (input_output_aliases
    # with a donated argument), so there is nothing to move: the output is
    # already the input.  Intentionally no loads, stores, or DMAs.
    del in_ref, out_ref


def _passthrough_impl(out):
    """Identity pass-through of `out` with zero HBM traffic (aliased, no-op)."""
    return pl.pallas_call(
        _noop_alias_kernel,
        out_shape=jax.ShapeDtypeStruct(out.shape, out.dtype),
        # Raw HBM refs — no auto-DMA, no VMEM staging, no (8,128) tiling rules.
        in_specs=[pl.BlockSpec(memory_space=pl.ANY)],
        out_specs=pl.BlockSpec(memory_space=pl.ANY),
        # Output buffer IS the input buffer.
        input_output_aliases={0: 0},
    )(out)


# Donating the argument lets XLA hand the parameter's buffer straight to the
# aliased custom-call output — no defensive copy, true in-place identity.
_passthrough = jax.jit(_passthrough_impl, donate_argnums=(0,))


def extract_output(x):
    """JAX/Pallas equivalent of ExtractOutput.forward.

    Args:
      x: a tuple/list (out, aux). `aux` is ignored, matching the PyTorch module.

    Returns:
      `out`, passed through the aliased zero-copy Pallas identity kernel.
    """
    out, _ = x  # pure Python tuple unpacking, exactly like the nn.Module
    return _passthrough(out)


if __name__ == "__main__":
    key = jax.random.PRNGKey(0)
    k_out, k_aux = jax.random.split(key)

    # Small shapes: `out` is an NCHW feature map, `aux` is a discarded tensor.
    out = jax.random.normal(k_out, (2, 4, 16, 16), dtype=jnp.float32)
    aux = jax.random.normal(k_aux, (2, 8, 32), dtype=jnp.float32)

    # Host snapshot for the correctness check: `out` is donated (its device
    # buffer is consumed in place by the aliased kernel output).
    expected = np.asarray(out)

    y = extract_output((out, aux))
    y = jax.block_until_ready(y)

    assert y.shape == expected.shape and y.dtype == expected.dtype
    assert np.array_equal(np.asarray(y), expected)

    print("KERNEL_OK")
</pallas_src>

<mosaic_0001>
module attributes {stable_mosaic.version = 11 : i64} {
  func.func @_noop_alias_kernel(%arg0: memref<2x4x16x16xf32, #tpu.memory_space<any>>, %arg1: memref<2x4x16x16xf32, #tpu.memory_space<any>>) attributes {dimension_semantics = [], scalar_prefetch = 0 : i64, scratch_operands = 0 : i64, tpu.core_type = #tpu.core_type<tc>} {
    return
  }
}

</mosaic_0001>

<llo_original>
// kernel: _passthrough_impl.1
$region0: #{_passthrough_impl.1}
  #allocation0 [shape = 'u32[]', space=smem, size = 0x4, offset = 0x4, fixed_abs, tag = 'smem constant byte address 0x4 - core index']
  #allocation1 [shape = 'u32[144,128]{1,0:T(1,128)}', space=vmem, size = 0x12000, scoped, tag = 'internal scratch']
  %s0 = inlined_call_operand.hbm [shape: f32[2,4,16,16], index: 0, kind: input, shape index: {}, may-alias: {0,1}]
  %s1 = inlined_call_operand.hbm [shape: f32[2,4,16,16], index: 1, kind: output, shape index: {}, may-alias: {0,1}]
  %s2 = sld [smem:[#allocation0]]
  $region2: #{_passthrough_impl.1} parent=0
    _
  %s4 = ssub.s32 1, %s2
  %s5 = scalar_select 0, %s4, %s2

</llo_original>
